<compile_context>
chip_gen: v5e
topology: v5e:2x2
jax: 0.10.0
libtpu: 0.0.40
codegen_flags: <defaults>
</compile_context>

<pallas_src>
import functools

import jax
import jax.numpy as jnp
from jax.experimental import pallas as pl
from jax.experimental.pallas import tpu as pltpu


def _cos_from_sums(w12, w1, w2, eps):
    # torch: cos = x.y / max(||x||*||y||, eps)
    #      == x.y * rsqrt(max(||x||^2 * ||y||^2, eps^2))   (eps > 0)
    denom_sq = jnp.maximum(w1 * w2, jnp.float32(eps) * jnp.float32(eps))
    return w12 * jax.lax.rsqrt(denom_sq)


def _row_sums(x_ref, y_ref):
    """Per-row <x,y>, ||x||^2, ||y||^2 of (TB, D) tiles as three (TB, 1) f32.

    Full 128-wide lane chunks are folded with pure VALU adds first, so each
    quantity needs exactly one cross-lane (XLU) reduction per batch tile.
    Inputs are widened to f32 per chunk (bf16 stays narrow in HBM/VMEM).
    """
    d = x_ref.shape[-1]
    n_full = d // 128

    def chunk(lo, hi):
        xc = x_ref[:, lo:hi].astype(jnp.float32)
        yc = y_ref[:, lo:hi].astype(jnp.float32)
        return xc * yc, xc * xc, yc * yc

    w12 = w1 = w2 = None
    if n_full:
        p12, p1, p2 = chunk(0, 128)
        for c in range(1, n_full):
            c12, c1, c2 = chunk(c * 128, (c + 1) * 128)
            p12, p1, p2 = p12 + c12, p1 + c1, p2 + c2
        w12 = jnp.sum(p12, axis=-1, keepdims=True)
        w1 = jnp.sum(p1, axis=-1, keepdims=True)
        w2 = jnp.sum(p2, axis=-1, keepdims=True)
    if n_full * 128 < d:  # sub-128 tail (D % 128 != 0); runs at most once
        t12, t1, t2 = chunk(n_full * 128, d)
        t12 = jnp.sum(t12, axis=-1, keepdims=True)
        t1 = jnp.sum(t1, axis=-1, keepdims=True)
        t2 = jnp.sum(t2, axis=-1, keepdims=True)
        if w12 is None:
            w12, w1, w2 = t12, t1, t2
        else:
            w12, w1, w2 = w12 + t12, w1 + t1, w2 + t2
    return w12, w1, w2


def _accum_lane_partials(x_ref, y_ref, s12, s1, s2, *, valid_cols):
    """Accumulate lane-parallel partial sums into (TB, 128) f32 scratch refs.

    x_ref, y_ref: (TB, TD) band tiles with TD % 128 == 0.  Only columns
    [0, valid_cols) contribute (static: TD for full tiles, bands % TD for the
    ragged last band tile).  Hot path is loads + VALU only; no XLU here.
    """
    td = x_ref.shape[-1]
    p12 = p1 = p2 = None
    for lo in range(0, td, 128):
        if lo >= valid_cols:
            break  # fully out-of-range lane chunk on the ragged tile: skip
        xc = x_ref[:, lo:lo + 128].astype(jnp.float32)
        yc = y_ref[:, lo:lo + 128].astype(jnp.float32)
        if lo + 128 > valid_cols:
            # Chunk straddles the true band edge: zero garbage lanes BEFORE
            # they can touch the dot product or the norms.
            col = jax.lax.broadcasted_iota(jnp.int32, xc.shape, 1)
            keep = col < (valid_cols - lo)
            xc = jnp.where(keep, xc, 0.0)
            yc = jnp.where(keep, yc, 0.0)
        if p12 is None:
            p12, p1, p2 = xc * yc, xc * xc, yc * yc
        else:
            p12 = p12 + xc * yc
            p1 = p1 + xc * xc
            p2 = p2 + yc * yc
    s12[...] += p12
    s1[...] += p1
    s2[...] += p2


def _cosine_kernel_single(x_ref, y_ref, cos_ref, *, eps: float):
    """bands fits in one tile: no scratch, no init/finalize predicates."""
    w12, w1, w2 = _row_sums(x_ref, y_ref)
    cos_ref[...] = _cos_from_sums(w12, w1, w2, eps)


def _cosine_kernel_multi(x_ref, y_ref, cos_ref, s12, s1, s2,
                         *, eps: float, bands: int, td: int):
    """Band axis is tiled: (TB, 128) f32 lane-partial accumulators in scratch,
    resident output block across the band axis, init/finalize via pl.when."""
    k = pl.program_id(1)
    last = pl.num_programs(1) - 1

    @pl.when(k == 0)
    def _init():
        s12[...] = jnp.zeros_like(s12)
        s1[...] = jnp.zeros_like(s1)
        s2[...] = jnp.zeros_like(s2)

    rem = bands % td  # static: valid columns on the ragged last band tile
    if rem == 0:
        _accum_lane_partials(x_ref, y_ref, s12, s1, s2, valid_cols=td)
    else:
        # Masking costs are paid only on the last (ragged) band tile.
        @pl.when(k != last)
        def _full_tile():
            _accum_lane_partials(x_ref, y_ref, s12, s1, s2, valid_cols=td)

        @pl.when(k == last)
        def _ragged_tile():
            _accum_lane_partials(x_ref, y_ref, s12, s1, s2, valid_cols=rem)

    @pl.when(k == last)
    def _finalize():
        # One cross-lane (XLU) reduction per quantity per batch tile.
        w12 = jnp.sum(s12[...], axis=-1, keepdims=True)
        w1 = jnp.sum(s1[...], axis=-1, keepdims=True)
        w2 = jnp.sum(s2[...], axis=-1, keepdims=True)
        cos_ref[...] = _cos_from_sums(w12, w1, w2, eps)


def sad_loss_pallas(
    x: jax.Array,
    y: jax.Array,
    eps: float = 1e-8,
    *,
    max_batch_tile: int = 8192,
    max_band_tile: int = 2048,            # multiple of 128
) -> jax.Array:
    """Spectral angle distance loss.  x, y: [batch, bands]."""
    assert x.shape == y.shape and x.ndim == 2
    batch, bands = x.shape
    itemsize = jnp.dtype(x.dtype).itemsize
    sublane = max(8, 32 // itemsize)      # 8 (f32), 16 (bf16), 32 (int8/fp8)

    # ---- band (reduction) tile: full extent when it fits (fast path),
    # otherwise a fixed multiple-of-128 tile with the ragged tail masked
    # IN-KERNEL (no HBM-doubling jnp.pad of the inputs).
    if bands <= max_band_tile:
        td = bands
        num_band_tiles = 1
    else:
        assert max_band_tile % 128 == 0 and max_band_tile >= 128
        td = max_band_tile
        num_band_tiles = pl.cdiv(bands, td)

    # ---- generation-aware VMEM sizing: ~1/2 physical for resident tiles,
    # ~3/4 physical for the scoped limit (v5e/v6e: 128 MiB, v7x: 64 MiB/TC).
    try:
        phys_vmem = int(pltpu.get_tpu_info().vmem_capacity_bytes)
    except Exception:
        phys_vmem = 64 * 1024 * 1024      # conservative (v7x-sized) fallback
    phys_vmem = min(max(phys_vmem, 32 * 1024 * 1024), 128 * 1024 * 1024)
    vmem_budget = phys_vmem // 2
    vmem_limit = (phys_vmem * 3) // 4

    # ---- batch tile from the VMEM budget: double-buffered inputs dominate;
    # the multi-band path adds 3x (tb,128) f32 accumulators; small slack for
    # in-flight f32 chunk temporaries (per-vreg-local dataflow, so tiny).
    row_bytes = 4 * td * itemsize + (1536 if num_band_tiles > 1 else 0) + 64
    tb = min(batch, max_batch_tile, max(vmem_budget // row_bytes, sublane))
    if tb < batch:
        tb = max((tb // sublane) * sublane, sublane)
    # Use at least two batch tiles when the batch allows it so the "parallel"
    # batch axis can shard across both TensorCores on v7x (costs at most a
    # few extra ~0.35us grid steps on single-TC generations).
    if pl.cdiv(batch, tb) == 1 and batch >= 2 * sublane:
        tb = pl.cdiv(pl.cdiv(batch, 2), sublane) * sublane
    num_batch_tiles = pl.cdiv(batch, tb)
    # NOTE: partial tail batch tiles compute on undefined rows; correctness
    # relies on per-row independence + masked output stores + the wrapper
    # consuming only cos[:batch].  Keep that invariant if refactoring.

    if num_band_tiles == 1:
        kernel = functools.partial(_cosine_kernel_single, eps=eps)
        grid = (num_batch_tiles,)
        in_specs = [pl.BlockSpec((tb, td), lambda i: (i, 0)),
                    pl.BlockSpec((tb, td), lambda i: (i, 0))]
        out_specs = pl.BlockSpec((tb, 1), lambda i: (i, 0))
        scratch_shapes = []
        dim_sem = ("parallel",)
    else:
        kernel = functools.partial(_cosine_kernel_multi,
                                   eps=eps, bands=bands, td=td)
        grid = (num_batch_tiles, num_band_tiles)
        in_specs = [pl.BlockSpec((tb, td), lambda i, k: (i, k)),
                    pl.BlockSpec((tb, td), lambda i, k: (i, k))]
        # Same output block across the band axis -> resident accumulator.
        out_specs = pl.BlockSpec((tb, 1), lambda i, k: (i, 0))
        scratch_shapes = [
            pltpu.VMEM((tb, 128), jnp.float32),
            pltpu.VMEM((tb, 128), jnp.float32),
            pltpu.VMEM((tb, 128), jnp.float32),
        ]
        dim_sem = ("parallel", "arbitrary")

    cos = pl.pallas_call(
        kernel,
        out_shape=jax.ShapeDtypeStruct((batch, 1), jnp.float32),
        grid_spec=pltpu.PrefetchScalarGridSpec(
            num_scalar_prefetch=0,
            grid=grid,
            in_specs=in_specs,
            out_specs=out_specs,
            scratch_shapes=scratch_shapes,
        ),
        compiler_params=pltpu.CompilerParams(
            dimension_semantics=dim_sem,
            vmem_limit_bytes=int(vmem_limit),
        ),
        cost_estimate=pl.CostEstimate(
            flops=6 * batch * bands + 5 * batch,
            transcendentals=batch,
            bytes_accessed=2 * batch * bands * itemsize + 4 * batch,
        ),
    )(x, y)

    # Glue on B scalars: acos + mean (sum / batch), matching torch (no clamp).
    return jnp.sum(jnp.arccos(cos[:, 0])) / batch


def sad_loss_ref(x, y, eps: float = 1e-8):
    """Pure-JAX reference for sanity checking."""
    x = x.astype(jnp.float32)
    y = y.astype(jnp.float32)
    w12 = jnp.sum(x * y, axis=1)
    w1 = jnp.sum(x * x, axis=1)
    w2 = jnp.sum(y * y, axis=1)
    cos = w12 / jnp.maximum(jnp.sqrt(w1 * w2), eps)
    return jnp.sum(jnp.arccos(cos)) / x.shape[0]


if __name__ == "__main__":
    key = jax.random.PRNGKey(0)
    kx, ky = jax.random.split(key)

    # Primary shape from the module docstring: [batch, bands].
    # Single-band-tile fast path + forced 2 batch tiles (v7x megacore rule).
    batch, bands = 16, 64
    x = jax.random.normal(kx, (batch, bands), dtype=jnp.float32)
    y = jax.random.normal(ky, (batch, bands), dtype=jnp.float32)
    out = jax.block_until_ready(sad_loss_pallas(x, y))
    ref = sad_loss_ref(x, y)
    assert jnp.allclose(out, ref, rtol=1e-5, atol=1e-5), (out, ref)

    # Multi-band-tile path with a ragged last band tile (in-kernel masking),
    # partial tail batch tile, bf16 inputs.
    b2, d2 = 40, 200
    x2 = jax.random.normal(kx, (b2, d2), dtype=jnp.bfloat16)
    y2 = jax.random.normal(ky, (b2, d2), dtype=jnp.bfloat16)
    out2 = jax.block_until_ready(
        sad_loss_pallas(x2, y2, max_batch_tile=16, max_band_tile=128))
    ref2 = sad_loss_ref(x2, y2)
    assert jnp.allclose(out2, ref2, rtol=1e-3, atol=1e-3), (out2, ref2)

    # Multi-band-tile path where the ragged tail is an exact 128 multiple
    # (exercises the whole-chunk skip) with a full-batch single tile.
    b3, d3 = 12, 384
    x3 = jax.random.normal(ky, (b3, d3), dtype=jnp.float32)
    y3 = jax.random.normal(kx, (b3, d3), dtype=jnp.float32)
    out3 = jax.block_until_ready(
        sad_loss_pallas(x3, y3, max_band_tile=256))
    ref3 = sad_loss_ref(x3, y3)
    assert jnp.allclose(out3, ref3, rtol=1e-5, atol=1e-5), (out3, ref3)

    print("KERNEL_OK")
</pallas_src>

<mosaic_0001>
module attributes {stable_mosaic.version = 11 : i64} {
  func.func @_cosine_kernel_single(%arg0: i32, %arg1: memref<8x64xf32, #tpu.memory_space<vmem>>, %arg2: memref<8x64xf32, #tpu.memory_space<vmem>>, %arg3: memref<8x1xf32, #tpu.memory_space<vmem>>) attributes {dimension_semantics = [#tpu.dimension_semantics<parallel>], iteration_bounds = array<i64: 2>, scalar_prefetch = 0 : i64, scratch_operands = 0 : i64, tpu.core_type = #tpu.core_type<tc>, window_params = [{transform_indices = @transform_0, window_bounds = array<i64: 8, 64>}, {transform_indices = @transform_1, window_bounds = array<i64: 8, 64>}, {transform_indices = @transform_2, window_bounds = array<i64: 8, 1>}]} {
    %c0 = arith.constant 0 : index
    %c0_0 = arith.constant 0 : index
    %0 = vector.load %arg1[%c0, %c0_0] : memref<8x64xf32, #tpu.memory_space<vmem>>, vector<8x64xf32>
    %c0_1 = arith.constant 0 : index
    %c0_2 = arith.constant 0 : index
    %1 = vector.load %arg2[%c0_1, %c0_2] : memref<8x64xf32, #tpu.memory_space<vmem>>, vector<8x64xf32>
    %2 = arith.mulf %0, %1 : vector<8x64xf32>
    %3 = arith.mulf %0, %0 : vector<8x64xf32>
    %4 = arith.mulf %1, %1 : vector<8x64xf32>
    %cst = arith.constant dense<0.000000e+00> : vector<8xf32>
    %5 = vector.multi_reduction <add>, %2, %cst [1] : vector<8x64xf32> to vector<8xf32>
    %6 = vector.shape_cast %5 : vector<8xf32> to vector<8x1xf32>
    %cst_3 = arith.constant dense<0.000000e+00> : vector<8xf32>
    %7 = vector.multi_reduction <add>, %3, %cst_3 [1] : vector<8x64xf32> to vector<8xf32>
    %8 = vector.shape_cast %7 : vector<8xf32> to vector<8x1xf32>
    %cst_4 = arith.constant dense<0.000000e+00> : vector<8xf32>
    %9 = vector.multi_reduction <add>, %4, %cst_4 [1] : vector<8x64xf32> to vector<8xf32>
    %10 = vector.shape_cast %9 : vector<8xf32> to vector<8x1xf32>
    %11 = arith.mulf %8, %10 : vector<8x1xf32>
    %cst_5 = arith.constant 9.99999993E-9 : f32
    %cst_6 = arith.constant 9.99999993E-9 : f32
    %12 = arith.mulf %cst_5, %cst_6 : f32
    %13 = vector.broadcast %12 : f32 to vector<8x1xf32>
    %14 = arith.maximumf %11, %13 : vector<8x1xf32>
    %15 = math.rsqrt %14 : vector<8x1xf32>
    %16 = arith.mulf %6, %15 : vector<8x1xf32>
    %c0_7 = arith.constant 0 : index
    %c0_8 = arith.constant 0 : index
    %17 = vector.load %arg3[%c0_7, %c0_8] : memref<8x1xf32, #tpu.memory_space<vmem>>, vector<8x1xf32>
    tpu.vector_store %arg3[%c0_7, %c0_8], %16 {strides = array<i32>} : memref<8x1xf32, #tpu.memory_space<vmem>>, vector<8x1xf32>,
    return
  }
  func.func @transform_0(%arg0: i32) -> (i32, i32) {
    %c0_i32 = arith.constant 0 : i32
    %c0_i32_0 = arith.constant 0 : i32
    return %arg0, %c0_i32 : i32, i32
  }
  func.func @transform_1(%arg0: i32) -> (i32, i32) {
    %c0_i32 = arith.constant 0 : i32
    %c0_i32_0 = arith.constant 0 : i32
    return %arg0, %c0_i32 : i32, i32
  }
  func.func @transform_2(%arg0: i32) -> (i32, i32) {
    %c0_i32 = arith.constant 0 : i32
    %c0_i32_0 = arith.constant 0 : i32
    return %arg0, %c0_i32 : i32, i32
  }
}

</mosaic_0001>

<llo_original>
// kernel: tpu_custom_call.1
$region0: #{tpu_custom_call.1}
  #allocation0 [shape = 'u32[]', space=smem, size = 0x4, offset = 0x4, fixed_abs, tag = 'smem constant byte address 0x4 - core index']
  #allocation1 [shape = 'u32[72,128]{1,0:T(1,128)}', space=vmem, size = 0x9000, scoped, tag = 'internal scratch']
  %s0 = inlined_call_operand.hbm [shape: f32[16,64], index: 0, kind: input, shape index: {}]
  %s1 = inlined_call_operand.hbm [shape: f32[16,64], index: 1, kind: input, shape index: {}]
  %s2 = inlined_call_operand.vmem [shape: f32[16,1], index: 2, kind: output, shape index: {}]
  %s3 = sld [smem:[#allocation0]]
  $region49: #{tpu_custom_call.1} parent=0
    _
  %s5 = ssub.s32 1, %s3
  %s6 = scalar_select 0, %s5, %s3
  $region1: #{tpu_custom_call.1} parent=0
    #allocation2 [shape = 'u8[8192]{0}', space=vmem, size = 0x2000, scoped, tag = 'input window, operand 0']
    #allocation3 [shape = 's32[2]{0}', space=sflag, size = 0x8, scoped, tag = 'scoped memory for tpu_custom_call.1']
    #allocation4 [shape = 'u8[8192]{0}', space=vmem, size = 0x2000, scoped, tag = 'input window, operand 1']
    #allocation5 [shape = 's32[2]{0}', space=sflag, size = 0x8, scoped, tag = 'scoped memory for tpu_custom_call.1']
    %7 = vsyncpa [#allocation3], 0
    %s8 = scalar_lea.sflag [#allocation3], 1
    %9 = vsyncpa %s8, 0
    %10 = vsyncpa [#allocation5], 0
    %s11 = scalar_lea.sflag [#allocation5], 1
    %12 = vsyncpa %s11, 0
    loop: start=0, step=1, limit=4
    $region2: #{tpu_custom_call.1} parent=1 // loop_pre_header
      _
    $region3: #{tpu_custom_call.1} parent=1 // loop_header
      %s14 = sphi 0, %s18
      %p15 = scmp.ge.s32.totalorder %s14, 4
      %s24 = sphi 0, %s26
      %s27 = sphi 0, %s24
      %s28 = sphi 0, %s27
      %s44 = sphi 0, %s28
      %s50 = sphi 0, %s52
      %s53 = sphi 0, %s50
      %s54 = sphi 0, %s53
      %s70 = sphi 0, %s54
      %s76 = sphi 0, %s78
      %s79 = sphi 0, %s76
      %s80 = sphi 0, %s79
      %s96 = sphi 0, %s80
    $region4: #{tpu_custom_call.1} parent=1 // loop_header_branch
      %17 = sbr.rel (%p15) target = $region8
    $region5: #{tpu_custom_call.1} parent=1 // loop_body
      %s19 = ssub.s32 %s14, 1
      %s20 = ssub.s32 %s14, 2
      %s21 = sadd.s32 %s14, 1
      %s22 = ssub.s32 %s14, %s21
      %p23 = scmp.eq.s32.totalorder %s22, 0
      %s25 = sadd.s32 %s24, 1
      %s26 = scalar_select %p23, %s24, %s25
      %p29 = pneg %p23
      %p30 = scmp.eq.s32.totalorder %s14, 1
      %p31 = por %p29, %p30
      %p32 = scmp.ne.s32.totalorder %s24, %s27
      %p33 = scmp.eq.s32.totalorder %s14, 0
      %p34 = por %p32, %p33
      %p35 = scmp.ne.s32.totalorder %s24, %s27
      %p36 = scmp.eq.s32.totalorder %s19, 1
      %p37 = por %p35, %p36
      %p38 = scmp.ne.s32.totalorder %s27, %s28
      %p39 = scmp.eq.s32.totalorder %s19, 0
      %p40 = por %p38, %p39
      %p41 = scmp.ne.s32.totalorder %s27, %s28
      %p42 = scmp.eq.s32.totalorder %s20, 1
      %p43 = por %p41, %p42
      %p45 = scmp.ne.s32.totalorder %s28, %s44
      %p46 = scmp.eq.s32.totalorder %s20, 0
      %p47 = por %p45, %p46
      %s48 = ssub.s32 %s14, %s21
      %p49 = scmp.eq.s32.totalorder %s48, 0
      %s51 = sadd.s32 %s50, 1
      %s52 = scalar_select %p49, %s50, %s51
      %p55 = pneg %p49
      %p56 = scmp.eq.s32.totalorder %s14, 1
      %p57 = por %p55, %p56
      %p58 = scmp.ne.s32.totalorder %s50, %s53
      %p59 = scmp.eq.s32.totalorder %s14, 0
      %p60 = por %p58, %p59
      %p61 = scmp.ne.s32.totalorder %s50, %s53
      %p62 = scmp.eq.s32.totalorder %s19, 1
      %p63 = por %p61, %p62
      %p64 = scmp.ne.s32.totalorder %s53, %s54
      %p65 = scmp.eq.s32.totalorder %s19, 0
      %p66 = por %p64, %p65
      %p67 = scmp.ne.s32.totalorder %s53, %s54
      %p68 = scmp.eq.s32.totalorder %s20, 1
      %p69 = por %p67, %p68
      %p71 = scmp.ne.s32.totalorder %s54, %s70
      %p72 = scmp.eq.s32.totalorder %s20, 0
      %p73 = por %p71, %p72
      %s74 = ssub.s32 %s14, %s21
      %p75 = scmp.eq.s32.totalorder %s74, 0
      %s77 = sadd.s32 %s76, 1
      %s78 = scalar_select %p75, %s76, %s77
      %p81 = pneg %p75
      %p82 = scmp.eq.s32.totalorder %s14, 1
      %p83 = por %p81, %p82
      %p84 = scmp.ne.s32.totalorder %s76, %s79
      %p85 = scmp.eq.s32.totalorder %s14, 0
      %p86 = por %p84, %p85
      %p87 = scmp.ne.s32.totalorder %s76, %s79
      %p88 = scmp.eq.s32.totalorder %s19, 1
      %p89 = por %p87, %p88
      %p90 = scmp.ne.s32.totalorder %s79, %s80
      %p91 = scmp.eq.s32.totalorder %s19, 0
      %p92 = por %p90, %p91
      %p93 = scmp.ne.s32.totalorder %s79, %s80
      %p94 = scmp.eq.s32.totalorder %s20, 1
      %p95 = por %p93, %p94
      %p97 = scmp.ne.s32.totalorder %s80, %s96
      %p98 = scmp.eq.s32.totalorder %s20, 0
      %p99 = por %p97, %p98
      %p100 = scmp.le.s32.totalorder 1, %s14
      %p101 = scmp.lt.s32.totalorder %s14, 3
      %p102 = pnand %p100, %p101
      %p103 = pneg %p102
      // Predicated region
      $region9: #{tpu_custom_call.1} parent=5 // pred_check
        _
      $region10: #{tpu_custom_call.1} parent=5 // pred_check_branch
        %105 = sbr.rel (%p102) target = $region12
      $region11: #{tpu_custom_call.1} parent=5 // pred_region
        %s106 = ssub.s32 %s14, 1
      $region12: #{tpu_custom_call.1} parent=5 // pred_fallthru
        _
      %p107 = scmp.lt.s32.totalorder %s14, 2
      // Predicated region
      $region13: #{tpu_custom_call.1} parent=5 // pred_check
        %p108 = pneg %p107
      $region14: #{tpu_custom_call.1} parent=5 // pred_check_branch
        %110 = sbr.rel (%p108) target = $region16
      $region15: #{tpu_custom_call.1} parent=5 // pred_region
        // Predicated region
        $region17: #{tpu_custom_call.1} parent=15 // pred_check
          %p111 = pneg %p34
        $region18: #{tpu_custom_call.1} parent=15 // pred_check_branch
          %113 = sbr.rel (%p111) target = $region20
        $region19: #{tpu_custom_call.1} parent=15 // pred_region
          %s114 = sand.u32 %s24, 1
          %s115 = scalar_lea.sflag [#allocation3], %s114
          %s116 = sand.u32 %s24, 1
          %s117 = smul.addr %s116, 8
          %s118 = scalar_lea.vmem [#allocation2], %s117
          %120 = vsyncadd %s115, 0
          %s121 = smul.addr %s14, 8
          %s122 = scalar_lea.hbm %s0, %s121
          %s124 = sshll.u32 %s122, 4
          %s125 = int_to_ptr.hbm [resolvable:$true] %s124
          %s126 = sshll.u32 %s118, 4
          %s127 = int_to_ptr.vmem [resolvable:$true] %s126
          %129 = dma.hbm_to_vmem [thread:$0]  %s125, 128, %s127, %s115
        $region20: #{tpu_custom_call.1} parent=15 // pred_fallthru
          _
        // Predicated region
        $region21: #{tpu_custom_call.1} parent=15 // pred_check
          %p130 = pneg %p60
        $region22: #{tpu_custom_call.1} parent=15 // pred_check_branch
          %132 = sbr.rel (%p130) target = $region24
        $region23: #{tpu_custom_call.1} parent=15 // pred_region
          %s133 = sand.u32 %s50, 1
          %s134 = scalar_lea.sflag [#allocation5], %s133
          %s135 = sand.u32 %s50, 1
          %s136 = smul.addr %s135, 8
          %s137 = scalar_lea.vmem [#allocation4], %s136
          %139 = vsyncadd %s134, 0
          %s140 = smul.addr %s14, 8
          %s141 = scalar_lea.hbm %s1, %s140
          %s143 = sshll.u32 %s141, 4
          %s144 = int_to_ptr.hbm [resolvable:$true] %s143
          %s145 = sshll.u32 %s137, 4
          %s146 = int_to_ptr.vmem [resolvable:$true] %s145
          %148 = dma.hbm_to_vmem [thread:$0]  %s144, 128, %s146, %s134
        $region24: #{tpu_custom_call.1} parent=15 // pred_fallthru
          _
      $region16: #{tpu_custom_call.1} parent=5 // pred_fallthru
        _
      %p149 = scmp.le.s32.totalorder 1, %s14
      %p150 = scmp.lt.s32.totalorder %s14, 3
      %p151 = pnand %p149, %p150
      %p152 = pneg %p151
      // Predicated region
      $region25: #{tpu_custom_call.1} parent=5 // pred_check
        _
      $region26: #{tpu_custom_call.1} parent=5 // pred_check_branch
        %154 = sbr.rel (%p151) target = $region28
      $region27: #{tpu_custom_call.1} parent=5 // pred_region
        %s155 = ssub.s32 %s14, 1
        %s156 = sand.u32 %s27, 1
        %s157 = scalar_lea.sflag [#allocation3], %s156
        %s158 = sand.u32 %s27, 1
        %s159 = smul.addr %s158, 8
        %s160 = scalar_lea.vmem [#allocation2], %s159
        // Predicated region
        $region29: #{tpu_custom_call.1} parent=27 // pred_check
          %p161 = pneg %p40
        $region30: #{tpu_custom_call.1} parent=27 // pred_check_branch
          %163 = sbr.rel (%p161) target = $region32
        $region31: #{tpu_custom_call.1} parent=27 // pred_region
          %165 = dma.done %s157, 128
        $region32: #{tpu_custom_call.1} parent=27 // pred_fallthru
          _
        %s166 = sand.u32 %s53, 1
        %s167 = scalar_lea.sflag [#allocation5], %s166
        %s168 = sand.u32 %s53, 1
        %s169 = smul.addr %s168, 8
        %s170 = scalar_lea.vmem [#allocation4], %s169
        // Predicated region
        $region33: #{tpu_custom_call.1} parent=27 // pred_check
          %p171 = pneg %p66
        $region34: #{tpu_custom_call.1} parent=27 // pred_check_branch
          %173 = sbr.rel (%p171) target = $region36
        $region35: #{tpu_custom_call.1} parent=27 // pred_region
          %175 = dma.done %s167, 128
        $region36: #{tpu_custom_call.1} parent=27 // pred_fallthru
          _
        %s176 = sand.u32 %s27, 1
        %s177 = scalar_lea.sflag [#allocation3], %s176
        %s178 = sand.u32 %s27, 1
        %s179 = smul.addr %s178, 8
        %s180 = scalar_lea.vmem [#allocation2], %s179
        %p181 = pneg %p40
        %p182 = pneg %p37
        %s183 = sand.u32 %s53, 1
        %s184 = scalar_lea.sflag [#allocation5], %s183
        %s185 = sand.u32 %s53, 1
        %s186 = smul.addr %s185, 8
        %s187 = scalar_lea.vmem [#allocation4], %s186
        %p188 = pneg %p66
        %p189 = pneg %p63
        %p190 = pneg %p92
        %p191 = pneg %p89
        %p192 = scmp.lt.s32.totalorder %s19, 1
        %s193 = scalar_select %p192, %s19, 1
        %s194 = smul.addr %s193, 8
        %s195 = scalar_lea.vmem %s2, %s194
        %p196 = scmp.lt.s32.totalorder %s19, 1
        %s197 = scalar_select %p196, %s19, 1
        %s198 = smul.addr %s197, 8
        %s199 = scalar_lea.vmem %s2, %s198
        %v200 = vld [vmem:[%s160] sm:$0xff]
        %v201 = vld [vmem:[%s170] sm:$0xff]
        %v202 = vmul.f32 %v200, %v201
        %v203 = vmul.f32 %v200, %v200
        %v204 = vmul.f32 %v201, %v201
        %vm205 = vcmask 523264
        %v206 = vsel %vm205, %v202, 0.0
        %207 = vadd.xlane.f32.xlu0 %v206
        %v208 = vpop.xlane.xlu0 %207
        %v209 = vsel %vm205, %v203, 0.0
        %210 = vadd.xlane.f32.xlu0 %v209
        %v211 = vpop.xlane.xlu0 %210
        %v212 = vsel %vm205, %v204, 0.0
        %213 = vadd.xlane.f32.xlu0 %v212
        %v214 = vpop.xlane.xlu0 %213
        %v215 = vmul.f32 %v211, %v214
        %v216 = vmax.f32 %v215, 1e-16
        %v217 = vrsqrt.pop %v216
        %v218 = vmul.f32 %v217, %v216
        %v219 = vmul.f32 %v218, %v217
        %v220 = vmul.f32 0.5, %v219
        %v221 = vsub.f32 1.5, %v220
        %v222 = vmul.f32 %v217, %v221
        %vm223 = vweird.f32 %v216
        %vm224 = vweird.f32 %v217
        %vm225 = vmor %vm223, %vm224
        %v226 = vsel %vm225, %v217, %v222
        %v227 = vmul.f32 %v208, %v226
        %vm228 = vcmask 7168
        %229 = vst.msk [vmem:[%s199] sm:$0xff] %vm228, %v227
        %p230 = scmp.lt.s32.totalorder %s19, 1
        %s231 = scalar_select %p230, %s19, 1
        %s232 = smul.addr %s231, 8
        %s233 = scalar_lea.vmem %s2, %s232
        // Predicated region
        $region37: #{tpu_custom_call.1} parent=27 // pred_check
          %p234 = pneg %p89
        $region38: #{tpu_custom_call.1} parent=27 // pred_check_branch
          %236 = sbr.rel (%p234) target = $region40
        $region39: #{tpu_custom_call.1} parent=27 // pred_region
          _
        $region40: #{tpu_custom_call.1} parent=27 // pred_fallthru
          _
      $region28: #{tpu_custom_call.1} parent=5 // pred_fallthru
        _
      %p237 = scmp.le.s32.totalorder 2, %s14
      // Predicated region
      $region41: #{tpu_custom_call.1} parent=5 // pred_check
        %p238 = pneg %p237
      $region42: #{tpu_custom_call.1} parent=5 // pred_check_branch
        %240 = sbr.rel (%p238) target = $region44
      $region43: #{tpu_custom_call.1} parent=5 // pred_region
        %s241 = ssub.s32 %s14, 2
        // Predicated region
        $region45: #{tpu_custom_call.1} parent=43 // pred_check
          %p242 = pneg %p95
        $region46: #{tpu_custom_call.1} parent=43 // pred_check_branch
          %244 = sbr.rel (%p242) target = $region48
        $region47: #{tpu_custom_call.1} parent=43 // pred_region
          %p245 = scmp.lt.s32.totalorder %s20, 1
          %s246 = scalar_select %p245, %s20, 1
          %s247 = smul.addr %s246, 8
          %s248 = scalar_lea.vmem %s2, %s247
        $region48: #{tpu_custom_call.1} parent=43 // pred_fallthru
          _
      $region44: #{tpu_custom_call.1} parent=5 // pred_fallthru
        _
    $region6: #{tpu_custom_call.1} parent=1 // loop_footer
      %s18 = sadd.s32 1, %s14
    $region7: #{tpu_custom_call.1} parent=1 // loop_footer_branch
      %13 = sbr.rel target = $region3
    $region8: #{tpu_custom_call.1} parent=1 // loop_exit
      _
    %249 = vsyncpa [#allocation3], 1
    %s250 = scalar_lea.sflag [#allocation3], 1
    %251 = vsyncpa %s250, 1
    %252 = vsyncpa [#allocation5], 1
    %s253 = scalar_lea.sflag [#allocation5], 1
    %254 = vsyncpa %s253, 1

</llo_original>
